<compile_context>
chip_gen: v7x
topology: tpu7x:2x2x1
jax: 0.10.0
libtpu: 0.0.40
codegen_flags: <defaults>
</compile_context>

<pallas_src>
import functools

import jax
import jax.numpy as jnp
from jax import lax
from jax.experimental import pallas as pl
from jax.experimental.pallas import tpu as pltpu


_DN = (((0,), (0,)), ((), ()))   # contract dim 0 of lhs with dim 0 of rhs  ->  (x_tile^T) @ W


def _pick_batch_block(B, T, Ncat, D, *, budget_bytes=12 << 20, max_bb=64):
    """Largest divisor-of-B batch block that fits the VMEM budget and leaves >=2 grid steps."""
    per_b = 2 * (T * Ncat * 4) + 2 * (Ncat * D * 4)     # double-buffered input + output, f32
    bb = max(1, budget_bytes // max(per_b, 1))
    bb = min(bb, max_bb, B)
    if B >= 2:
        bb = min(bb, max(1, B // 2))                     # >=2 grid steps (v7x megacore sharding)
    while B % bb != 0:                                   # avoid ragged tail blocks
        bb -= 1
    return bb


def _make_kernel(bb, has_mark):
    if has_mark:
        def kernel(x_ref, xm_ref, w_ref, b_ref, out_ref):
            # x_ref: (BB, T, N) f32 ; xm_ref: (BB, T, M) f32 ; w_ref: (T, D) bf16 ; b_ref: (1, D) f32
            w = w_ref[...]
            bias = b_ref[...]

            def body(i, carry):
                xt = jnp.concatenate([x_ref[i], xm_ref[i]], axis=1)          # (T, N+M), tiny tile
                y = lax.dot_general(xt.astype(jnp.bfloat16), w, _DN,
                                    preferred_element_type=jnp.float32)      # (N+M, D)
                out_ref[i] = (y + bias).astype(out_ref.dtype)
                return carry

            lax.fori_loop(0, bb, body, 0, unroll=bb <= 8)
    else:
        def kernel(x_ref, w_ref, b_ref, out_ref):
            w = w_ref[...]
            bias = b_ref[...]

            def body(i, carry):
                y = lax.dot_general(x_ref[i].astype(jnp.bfloat16), w, _DN,
                                    preferred_element_type=jnp.float32)      # (N, D)
                out_ref[i] = (y + bias).astype(out_ref.dtype)
                return carry

            lax.fori_loop(0, bb, body, 0, unroll=bb <= 8)
    return kernel


def inverted_embedding(x, x_mark, w, b):
    """x: (B, T, N); x_mark: (B, T, M) or None; w: (T, d_model) (= PyTorch weight.T); b: (1, d_model)."""
    B, T, N = x.shape
    D = w.shape[1]
    M = 0 if x_mark is None else x_mark.shape[2]
    Ncat = N + M

    bb = _pick_batch_block(B, T, Ncat, D)
    nb = B // bb

    w_bf16 = w.astype(jnp.bfloat16)                      # one-time cast, halves weight DMA

    x_spec = pl.BlockSpec((bb, T, N), lambda bi: (bi, 0, 0))
    w_spec = pl.BlockSpec((T, D), lambda bi: (0, 0))     # VMEM-resident across grid steps
    b_spec = pl.BlockSpec((1, D), lambda bi: (0, 0))
    out_spec = pl.BlockSpec((bb, Ncat, D), lambda bi: (bi, 0, 0))

    bytes_accessed = (x.size * 4 + w_bf16.size * 2 + b.size * 4 + B * Ncat * D * 4)
    if x_mark is None:
        kernel = _make_kernel(bb, has_mark=False)
        in_specs = [x_spec, w_spec, b_spec]
        args = (x, w_bf16, b)
    else:
        xm_spec = pl.BlockSpec((bb, T, M), lambda bi: (bi, 0, 0))
        kernel = _make_kernel(bb, has_mark=True)
        in_specs = [x_spec, xm_spec, w_spec, b_spec]
        args = (x, x_mark, w_bf16, b)
        bytes_accessed += x_mark.size * 4

    fn = pl.pallas_call(
        kernel,
        out_shape=jax.ShapeDtypeStruct((B, Ncat, D), x.dtype),
        grid_spec=pltpu.PrefetchScalarGridSpec(
            num_scalar_prefetch=0,
            grid=(nb,),
            in_specs=in_specs,
            out_specs=out_spec,
        ),
        compiler_params=pltpu.CompilerParams(
            dimension_semantics=("parallel",),
            vmem_limit_bytes=32 * 1024 * 1024,
        ),
        cost_estimate=pl.CostEstimate(
            flops=2 * B * Ncat * T * D,
            transcendentals=0,
            bytes_accessed=int(bytes_accessed),
        ),
    )
    # TODO(synk): nn.Dropout is identity in inference; training-mode dropout not implemented.
    return fn(*args)


def _reference(x, x_mark, w, b):
    xp = jnp.swapaxes(x, 1, 2)                               # (B, N, T)
    if x_mark is not None:
        xp = jnp.concatenate([xp, jnp.swapaxes(x_mark, 1, 2)], axis=1)
    return xp @ w + b


if __name__ == "__main__":
    # batch, seq_len (== c_in of the Linear), n_vars, n_mark_features, d_model (lane-dense)
    B, T, N, M, D = 8, 16, 6, 4, 128

    key = jax.random.PRNGKey(0)
    kx, km, kw, kb = jax.random.split(key, 4)
    x = jax.random.normal(kx, (B, T, N), jnp.float32)
    x_mark = jax.random.normal(km, (B, T, M), jnp.float32)
    w = 0.05 * jax.random.normal(kw, (T, D), jnp.float32)    # pre-transposed (c_in, d_model)
    b = 0.05 * jax.random.normal(kb, (1, D), jnp.float32)

    out = inverted_embedding(x, x_mark, w, b)        # x_mark path
    out_nomark = inverted_embedding(x, None, w, b)   # x_mark is None path
    jax.block_until_ready((out, out_nomark))

    assert out.shape == (B, N + M, D)
    assert out_nomark.shape == (B, N, D)
    # bf16 MXU operands with f32 accumulation -> compare against f32 reference with tolerance.
    ok1 = jnp.allclose(out, _reference(x, x_mark, w, b), rtol=2e-2, atol=2e-2)
    ok2 = jnp.allclose(out_nomark, _reference(x, None, w, b), rtol=2e-2, atol=2e-2)
    assert bool(ok1) and bool(ok2)
    print("KERNEL_OK")
</pallas_src>

<mosaic_0001>
module attributes {stable_mosaic.version = 11 : i64} {
  func.func @kernel(%arg0: i32, %arg1: memref<4x16x6xf32, #tpu.memory_space<vmem>>, %arg2: memref<4x16x4xf32, #tpu.memory_space<vmem>>, %arg3: memref<16x128xbf16, #tpu.memory_space<vmem>>, %arg4: memref<1x128xf32, #tpu.memory_space<vmem>>, %arg5: memref<4x10x128xf32, #tpu.memory_space<vmem>>) attributes {dimension_semantics = [#tpu.dimension_semantics<parallel>], iteration_bounds = array<i64: 2>, scalar_prefetch = 0 : i64, scratch_operands = 0 : i64, tpu.core_type = #tpu.core_type<tc>, window_params = [{transform_indices = @transform_0, window_bounds = array<i64: 4, 16, 6>}, {transform_indices = @transform_1, window_bounds = array<i64: 4, 16, 4>}, {pipeline_mode = #tpu.pipeline_mode<synchronous>, transform_indices = @transform_2, window_bounds = array<i64: 16, 128>}, {pipeline_mode = #tpu.pipeline_mode<synchronous>, transform_indices = @transform_3, window_bounds = array<i64: 1, 128>}, {transform_indices = @transform_4, window_bounds = array<i64: 4, 10, 128>}]} {
    %c0 = arith.constant 0 : index
    %c0_0 = arith.constant 0 : index
    %0 = vector.load %arg3[%c0, %c0_0] : memref<16x128xbf16, #tpu.memory_space<vmem>>, vector<16x128xbf16>
    %c0_1 = arith.constant 0 : index
    %c0_2 = arith.constant 0 : index
    %1 = vector.load %arg4[%c0_1, %c0_2] : memref<1x128xf32, #tpu.memory_space<vmem>>, vector<1x128xf32>
    %c0_i32 = arith.constant 0 : i32
    %2 = arith.index_cast %c0_i32 : i32 to index
    %c0_3 = arith.constant 0 : index
    %c0_4 = arith.constant 0 : index
    %3 = vector.load %arg1[%2, %c0_3, %c0_4] : memref<4x16x6xf32, #tpu.memory_space<vmem>>, vector<1x16x6xf32>
    %4 = vector.shape_cast %3 : vector<1x16x6xf32> to vector<16x6xf32>
    %5 = arith.index_cast %c0_i32 : i32 to index
    %c0_5 = arith.constant 0 : index
    %c0_6 = arith.constant 0 : index
    %6 = vector.load %arg2[%5, %c0_5, %c0_6] : memref<4x16x4xf32, #tpu.memory_space<vmem>>, vector<1x16x4xf32>
    %7 = vector.shape_cast %6 : vector<1x16x4xf32> to vector<16x4xf32>
    %8 = tpu.concatenate %4, %7 in 1 : vector<16x6xf32>, vector<16x4xf32> -> vector<16x10xf32>
    %9 = arith.truncf %8 : vector<16x10xf32> to vector<16x10xbf16>
    %cst = arith.constant dense<0.000000e+00> : vector<10x128xf32>
    %10 = tpu.matmul %9, %0, %cst {dimension_numbers = #tpu.dot_dimension_numbers<[0], [0], [1], [1], [0, 1, 1, 1], [], []>} : vector<16x10xbf16>, vector<16x128xbf16>, vector<10x128xf32> -> vector<10x128xf32>
    %11 = vector.broadcast %1 : vector<1x128xf32> to vector<10x128xf32>
    %12 = arith.addf %10, %11 : vector<10x128xf32>
    %13 = arith.index_cast %c0_i32 : i32 to index
    %c0_7 = arith.constant 0 : index
    %c0_8 = arith.constant 0 : index
    %14 = vector.load %arg5[%13, %c0_7, %c0_8] : memref<4x10x128xf32, #tpu.memory_space<vmem>>, vector<1x10x128xf32>
    %15 = vector.shape_cast %14 : vector<1x10x128xf32> to vector<10x128xf32>
    %16 = vector.shape_cast %12 : vector<10x128xf32> to vector<1x10x128xf32>
    tpu.vector_store %arg5[%13, %c0_7, %c0_8], %16 {strides = array<i32>} : memref<4x10x128xf32, #tpu.memory_space<vmem>>, vector<1x10x128xf32>,
    %c1_i32 = arith.constant 1 : i32
    %17 = arith.index_cast %c1_i32 : i32 to index
    %c0_9 = arith.constant 0 : index
    %c0_10 = arith.constant 0 : index
    %18 = vector.load %arg1[%17, %c0_9, %c0_10] : memref<4x16x6xf32, #tpu.memory_space<vmem>>, vector<1x16x6xf32>
    %19 = vector.shape_cast %18 : vector<1x16x6xf32> to vector<16x6xf32>
    %20 = arith.index_cast %c1_i32 : i32 to index
    %c0_11 = arith.constant 0 : index
    %c0_12 = arith.constant 0 : index
    %21 = vector.load %arg2[%20, %c0_11, %c0_12] : memref<4x16x4xf32, #tpu.memory_space<vmem>>, vector<1x16x4xf32>
    %22 = vector.shape_cast %21 : vector<1x16x4xf32> to vector<16x4xf32>
    %23 = tpu.concatenate %19, %22 in 1 : vector<16x6xf32>, vector<16x4xf32> -> vector<16x10xf32>
    %24 = arith.truncf %23 : vector<16x10xf32> to vector<16x10xbf16>
    %cst_13 = arith.constant dense<0.000000e+00> : vector<10x128xf32>
    %25 = tpu.matmul %24, %0, %cst_13 {dimension_numbers = #tpu.dot_dimension_numbers<[0], [0], [1], [1], [0, 1, 1, 1], [], []>} : vector<16x10xbf16>, vector<16x128xbf16>, vector<10x128xf32> -> vector<10x128xf32>
    %26 = vector.broadcast %1 : vector<1x128xf32> to vector<10x128xf32>
    %27 = arith.addf %25, %26 : vector<10x128xf32>
    %28 = arith.index_cast %c1_i32 : i32 to index
    %c0_14 = arith.constant 0 : index
    %c0_15 = arith.constant 0 : index
    %29 = vector.load %arg5[%28, %c0_14, %c0_15] : memref<4x10x128xf32, #tpu.memory_space<vmem>>, vector<1x10x128xf32>
    %30 = vector.shape_cast %29 : vector<1x10x128xf32> to vector<10x128xf32>
    %31 = vector.shape_cast %27 : vector<10x128xf32> to vector<1x10x128xf32>
    tpu.vector_store %arg5[%28, %c0_14, %c0_15], %31 {strides = array<i32>} : memref<4x10x128xf32, #tpu.memory_space<vmem>>, vector<1x10x128xf32>,
    %c2_i32 = arith.constant 2 : i32
    %32 = arith.index_cast %c2_i32 : i32 to index
    %c0_16 = arith.constant 0 : index
    %c0_17 = arith.constant 0 : index
    %33 = vector.load %arg1[%32, %c0_16, %c0_17] : memref<4x16x6xf32, #tpu.memory_space<vmem>>, vector<1x16x6xf32>
    %34 = vector.shape_cast %33 : vector<1x16x6xf32> to vector<16x6xf32>
    %35 = arith.index_cast %c2_i32 : i32 to index
    %c0_18 = arith.constant 0 : index
    %c0_19 = arith.constant 0 : index
    %36 = vector.load %arg2[%35, %c0_18, %c0_19] : memref<4x16x4xf32, #tpu.memory_space<vmem>>, vector<1x16x4xf32>
    %37 = vector.shape_cast %36 : vector<1x16x4xf32> to vector<16x4xf32>
    %38 = tpu.concatenate %34, %37 in 1 : vector<16x6xf32>, vector<16x4xf32> -> vector<16x10xf32>
    %39 = arith.truncf %38 : vector<16x10xf32> to vector<16x10xbf16>
    %cst_20 = arith.constant dense<0.000000e+00> : vector<10x128xf32>
    %40 = tpu.matmul %39, %0, %cst_20 {dimension_numbers = #tpu.dot_dimension_numbers<[0], [0], [1], [1], [0, 1, 1, 1], [], []>} : vector<16x10xbf16>, vector<16x128xbf16>, vector<10x128xf32> -> vector<10x128xf32>
    %41 = vector.broadcast %1 : vector<1x128xf32> to vector<10x128xf32>
    %42 = arith.addf %40, %41 : vector<10x128xf32>
    %43 = arith.index_cast %c2_i32 : i32 to index
    %c0_21 = arith.constant 0 : index
    %c0_22 = arith.constant 0 : index
    %44 = vector.load %arg5[%43, %c0_21, %c0_22] : memref<4x10x128xf32, #tpu.memory_space<vmem>>, vector<1x10x128xf32>
    %45 = vector.shape_cast %44 : vector<1x10x128xf32> to vector<10x128xf32>
    %46 = vector.shape_cast %42 : vector<10x128xf32> to vector<1x10x128xf32>
    tpu.vector_store %arg5[%43, %c0_21, %c0_22], %46 {strides = array<i32>} : memref<4x10x128xf32, #tpu.memory_space<vmem>>, vector<1x10x128xf32>,
    %c3_i32 = arith.constant 3 : i32
    %47 = arith.index_cast %c3_i32 : i32 to index
    %c0_23 = arith.constant 0 : index
    %c0_24 = arith.constant 0 : index
    %48 = vector.load %arg1[%47, %c0_23, %c0_24] : memref<4x16x6xf32, #tpu.memory_space<vmem>>, vector<1x16x6xf32>
    %49 = vector.shape_cast %48 : vector<1x16x6xf32> to vector<16x6xf32>
    %50 = arith.index_cast %c3_i32 : i32 to index
    %c0_25 = arith.constant 0 : index
    %c0_26 = arith.constant 0 : index
    %51 = vector.load %arg2[%50, %c0_25, %c0_26] : memref<4x16x4xf32, #tpu.memory_space<vmem>>, vector<1x16x4xf32>
    %52 = vector.shape_cast %51 : vector<1x16x4xf32> to vector<16x4xf32>
    %53 = tpu.concatenate %49, %52 in 1 : vector<16x6xf32>, vector<16x4xf32> -> vector<16x10xf32>
    %54 = arith.truncf %53 : vector<16x10xf32> to vector<16x10xbf16>
    %cst_27 = arith.constant dense<0.000000e+00> : vector<10x128xf32>
    %55 = tpu.matmul %54, %0, %cst_27 {dimension_numbers = #tpu.dot_dimension_numbers<[0], [0], [1], [1], [0, 1, 1, 1], [], []>} : vector<16x10xbf16>, vector<16x128xbf16>, vector<10x128xf32> -> vector<10x128xf32>
    %56 = vector.broadcast %1 : vector<1x128xf32> to vector<10x128xf32>
    %57 = arith.addf %55, %56 : vector<10x128xf32>
    %58 = arith.index_cast %c3_i32 : i32 to index
    %c0_28 = arith.constant 0 : index
    %c0_29 = arith.constant 0 : index
    %59 = vector.load %arg5[%58, %c0_28, %c0_29] : memref<4x10x128xf32, #tpu.memory_space<vmem>>, vector<1x10x128xf32>
    %60 = vector.shape_cast %59 : vector<1x10x128xf32> to vector<10x128xf32>
    %61 = vector.shape_cast %57 : vector<10x128xf32> to vector<1x10x128xf32>
    tpu.vector_store %arg5[%58, %c0_28, %c0_29], %61 {strides = array<i32>} : memref<4x10x128xf32, #tpu.memory_space<vmem>>, vector<1x10x128xf32>,
    %c4_i32 = arith.constant 4 : i32
    return
  }
  func.func @transform_0(%arg0: i32) -> (i32, i32, i32) {
    %c0_i32 = arith.constant 0 : i32
    %c0_i32_0 = arith.constant 0 : i32
    %c0_i32_1 = arith.constant 0 : i32
    return %arg0, %c0_i32, %c0_i32_0 : i32, i32, i32
  }
  func.func @transform_1(%arg0: i32) -> (i32, i32, i32) {
    %c0_i32 = arith.constant 0 : i32
    %c0_i32_0 = arith.constant 0 : i32
    %c0_i32_1 = arith.constant 0 : i32
    return %arg0, %c0_i32, %c0_i32_0 : i32, i32, i32
  }
  func.func @transform_2(%arg0: i32) -> (i32, i32) {
    %c0_i32 = arith.constant 0 : i32
    %c0_i32_0 = arith.constant 0 : i32
    %c0_i32_1 = arith.constant 0 : i32
    return %c0_i32, %c0_i32_0 : i32, i32
  }
  func.func @transform_3(%arg0: i32) -> (i32, i32) {
    %c0_i32 = arith.constant 0 : i32
    %c0_i32_0 = arith.constant 0 : i32
    %c0_i32_1 = arith.constant 0 : i32
    return %c0_i32, %c0_i32_0 : i32, i32
  }
  func.func @transform_4(%arg0: i32) -> (i32, i32, i32) {
    %c0_i32 = arith.constant 0 : i32
    %c0_i32_0 = arith.constant 0 : i32
    %c0_i32_1 = arith.constant 0 : i32
    return %arg0, %c0_i32, %c0_i32_0 : i32, i32, i32
  }
}

</mosaic_0001>

<llo_original>
// kernel: tpu_custom_call.1
$region0: #{tpu_custom_call.1}
  #allocation0 [shape = 'u32[]', space=smem, size = 0x4, offset = 0x4, fixed_abs, tag = 'smem constant byte address 0x4 - core index']
  #allocation1 [shape = 'u32[144,128]{1,0:T(1,128)}', space=vmem, size = 0x12000, scoped, tag = 'internal scratch']
  %s0 = inlined_call_operand.vmem [shape: f32[8,16,6], index: 0, kind: input, shape index: {}]
  %s1 = inlined_call_operand.vmem [shape: f32[8,16,4], index: 1, kind: input, shape index: {}]
  %s2 = inlined_call_operand.vmem [shape: bf16[16,128], index: 2, kind: input, shape index: {}]
  %s3 = inlined_call_operand.vmem [shape: f32[1,128], index: 3, kind: input, shape index: {}]
  %s4 = inlined_call_operand.vmem [shape: f32[8,10,128], index: 4, kind: output, shape index: {}]
  %s5 = sld [smem:[#allocation0]]
  $region49: #{tpu_custom_call.1} parent=0
    _
  %s7 = ssub.s32 1, %s5
  %s8 = scalar_select 0, %s7, %s5
  loop: start=0, step=1, limit=4
  $region2: #{tpu_custom_call.1} parent=0 // loop_pre_header
    _
  $region3: #{tpu_custom_call.1} parent=0 // loop_header
    %s10 = sphi 0, %s14
    %p11 = scmp.ge.s32.totalorder %s10, 4
    %s20 = sphi 0, %s22
    %s23 = sphi 0, %s20
    %s24 = sphi 0, %s23
    %s40 = sphi 0, %s24
    %s46 = sphi 0, %s48
    %s49 = sphi 0, %s46
    %s50 = sphi 0, %s49
    %s66 = sphi 0, %s50
    %s70 = sphi 0, %s70
    %s72 = sphi 0, %s70
    %s73 = sphi 0, %s72
    %s87 = sphi 0, %s73
    %s91 = sphi 0, %s91
    %s93 = sphi 0, %s91
    %s94 = sphi 0, %s93
    %s108 = sphi 0, %s94
    %s114 = sphi 0, %s116
    %s117 = sphi 0, %s114
    %s118 = sphi 0, %s117
    %s134 = sphi 0, %s118
  $region4: #{tpu_custom_call.1} parent=0 // loop_header_branch
    %13 = sbr.rel (%p11) target = $region8
  $region5: #{tpu_custom_call.1} parent=0 // loop_body
    %s15 = ssub.s32 %s10, 1
    %s16 = ssub.s32 %s10, 2
    %s17 = sadd.s32 %s10, 1
    %s18 = ssub.s32 %s10, %s17
    %p19 = scmp.eq.s32.totalorder %s18, 0
    %s21 = sadd.s32 %s20, 1
    %s22 = scalar_select %p19, %s20, %s21
    %p25 = pneg %p19
    %p26 = scmp.eq.s32.totalorder %s10, 1
    %p27 = por %p25, %p26
    %p28 = scmp.ne.s32.totalorder %s20, %s23
    %p29 = scmp.eq.s32.totalorder %s10, 0
    %p30 = por %p28, %p29
    %p31 = scmp.ne.s32.totalorder %s20, %s23
    %p32 = scmp.eq.s32.totalorder %s15, 1
    %p33 = por %p31, %p32
    %p34 = scmp.ne.s32.totalorder %s23, %s24
    %p35 = scmp.eq.s32.totalorder %s15, 0
    %p36 = por %p34, %p35
    %p37 = scmp.ne.s32.totalorder %s23, %s24
    %p38 = scmp.eq.s32.totalorder %s16, 1
    %p39 = por %p37, %p38
    %p41 = scmp.ne.s32.totalorder %s24, %s40
    %p42 = scmp.eq.s32.totalorder %s16, 0
    %p43 = por %p41, %p42
    %s44 = ssub.s32 %s10, %s17
    %p45 = scmp.eq.s32.totalorder %s44, 0
    %s47 = sadd.s32 %s46, 1
    %s48 = scalar_select %p45, %s46, %s47
    %p51 = pneg %p45
    %p52 = scmp.eq.s32.totalorder %s10, 1
    %p53 = por %p51, %p52
    %p54 = scmp.ne.s32.totalorder %s46, %s49
    %p55 = scmp.eq.s32.totalorder %s10, 0
    %p56 = por %p54, %p55
    %p57 = scmp.ne.s32.totalorder %s46, %s49
    %p58 = scmp.eq.s32.totalorder %s15, 1
    %p59 = por %p57, %p58
    %p60 = scmp.ne.s32.totalorder %s49, %s50
    %p61 = scmp.eq.s32.totalorder %s15, 0
    %p62 = por %p60, %p61
    %p63 = scmp.ne.s32.totalorder %s49, %s50
    %p64 = scmp.eq.s32.totalorder %s16, 1
    %p65 = por %p63, %p64
    %p67 = scmp.ne.s32.totalorder %s50, %s66
    %p68 = scmp.eq.s32.totalorder %s16, 0
    %p69 = por %p67, %p68
    %s71 = sadd.s32 %s70, 1
    %p74 = scmp.eq.s32.totalorder %s10, 1
    %p75 = scmp.ne.s32.totalorder %s70, %s72
    %p76 = scmp.eq.s32.totalorder %s10, 0
    %p77 = por %p75, %p76
    %p78 = scmp.ne.s32.totalorder %s70, %s72
    %p79 = scmp.eq.s32.totalorder %s15, 1
    %p80 = por %p78, %p79
    %p81 = scmp.ne.s32.totalorder %s72, %s73
    %p82 = scmp.eq.s32.totalorder %s15, 0
    %p83 = por %p81, %p82
    %p84 = scmp.ne.s32.totalorder %s72, %s73
    %p85 = scmp.eq.s32.totalorder %s16, 1
    %p86 = por %p84, %p85
    %p88 = scmp.ne.s32.totalorder %s73, %s87
    %p89 = scmp.eq.s32.totalorder %s16, 0
    %p90 = por %p88, %p89
    %s92 = sadd.s32 %s91, 1
    %p95 = scmp.eq.s32.totalorder %s10, 1
    %p96 = scmp.ne.s32.totalorder %s91, %s93
    %p97 = scmp.eq.s32.totalorder %s10, 0
    %p98 = por %p96, %p97
    %p99 = scmp.ne.s32.totalorder %s91, %s93
    %p100 = scmp.eq.s32.totalorder %s15, 1
    %p101 = por %p99, %p100
    %p102 = scmp.ne.s32.totalorder %s93, %s94
    %p103 = scmp.eq.s32.totalorder %s15, 0
    %p104 = por %p102, %p103
    %p105 = scmp.ne.s32.totalorder %s93, %s94
    %p106 = scmp.eq.s32.totalorder %s16, 1
    %p107 = por %p105, %p106
    %p109 = scmp.ne.s32.totalorder %s94, %s108
    %p110 = scmp.eq.s32.totalorder %s16, 0
    %p111 = por %p109, %p110
    %s112 = ssub.s32 %s10, %s17
    %p113 = scmp.eq.s32.totalorder %s112, 0
    %s115 = sadd.s32 %s114, 1
    %s116 = scalar_select %p113, %s114, %s115
    %p119 = pneg %p113
    %p120 = scmp.eq.s32.totalorder %s10, 1
    %p121 = por %p119, %p120
    %p122 = scmp.ne.s32.totalorder %s114, %s117
    %p123 = scmp.eq.s32.totalorder %s10, 0
    %p124 = por %p122, %p123
    %p125 = scmp.ne.s32.totalorder %s114, %s117
    %p126 = scmp.eq.s32.totalorder %s15, 1
    %p127 = por %p125, %p126
    %p128 = scmp.ne.s32.totalorder %s117, %s118
    %p129 = scmp.eq.s32.totalorder %s15, 0
    %p130 = por %p128, %p129
    %p131 = scmp.ne.s32.totalorder %s117, %s118
    %p132 = scmp.eq.s32.totalorder %s16, 1
    %p133 = por %p131, %p132
    %p135 = scmp.ne.s32.totalorder %s118, %s134
    %p136 = scmp.eq.s32.totalorder %s16, 0
    %p137 = por %p135, %p136
    %p138 = scmp.le.s32.totalorder 1, %s10
    %p139 = scmp.lt.s32.totalorder %s10, 3
    %p140 = pnand %p138, %p139
    %p141 = pneg %p140
    // Predicated region
    $region9: #{tpu_custom_call.1} parent=5 // pred_check
      _
    $region10: #{tpu_custom_call.1} parent=5 // pred_check_branch
      %143 = sbr.rel (%p140) target = $region12
    $region11: #{tpu_custom_call.1} parent=5 // pred_region
      %s144 = ssub.s32 %s10, 1
      // Predicated region
      $region13: #{tpu_custom_call.1} parent=11 // pred_check
        %p145 = pneg %p83
      $region14: #{tpu_custom_call.1} parent=11 // pred_check_branch
        %147 = sbr.rel (%p145) target = $region16
      $region15: #{tpu_custom_call.1} parent=11 // pred_region
        _
      $region16: #{tpu_custom_call.1} parent=11 // pred_fallthru
        _
      // Predicated region
      $region17: #{tpu_custom_call.1} parent=11 // pred_check
        %p148 = pneg %p104
      $region18: #{tpu_custom_call.1} parent=11 // pred_check_branch
        %150 = sbr.rel (%p148) target = $region20
      $region19: #{tpu_custom_call.1} parent=11 // pred_region
        _
      $region20: #{tpu_custom_call.1} parent=11 // pred_fallthru
        _
    $region12: #{tpu_custom_call.1} parent=5 // pred_fallthru
      _
    %p151 = scmp.lt.s32.totalorder %s10, 2
    // Predicated region
    $region21: #{tpu_custom_call.1} parent=5 // pred_check
      %p152 = pneg %p151
    $region22: #{tpu_custom_call.1} parent=5 // pred_check_branch
      %154 = sbr.rel (%p152) target = $region24
    $region23: #{tpu_custom_call.1} parent=5 // pred_region
      // Predicated region
      $region25: #{tpu_custom_call.1} parent=23 // pred_check
        %p155 = pneg %p30
      $region26: #{tpu_custom_call.1} parent=23 // pred_check_branch
        %157 = sbr.rel (%p155) target = $region28
      $region27: #{tpu_custom_call.1} parent=23 // pred_region
        %s158 = smul.u32 4, %s10
        %p159 = scmp.lt.s32.totalorder %s158, 7
        %s160 = scalar_select %p159, %s158, 7
        %s161 = smul.addr %s160, 2
        %s162 = smul.addr %s161, 8
        %s163 = scalar_lea.vmem %s0, %s162
        %s164 = smul.u32 4, %s10
      $region28: #{tpu_custom_call.1} parent=23 // pred_fallthru
        _
      // Predicated region
      $region29: #{tpu_custom_call.1} parent=23 // pred_check
        %p165 = pneg %p56
      $region30: #{tpu_custom_call.1} parent=23 // pred_check_branch
        %167 = sbr.rel (%p165) target = $region32
      $region31: #{tpu_custom_call.1} parent=23 // pred_region
        %s168 = smul.u32 4, %s10
        %p169 = scmp.lt.s32.totalorder %s168, 7
        %s170 = scalar_select %p169, %s168, 7
        %s171 = smul.addr %s170, 2
        %s172 = smul.addr %s171, 8
        %s173 = scalar_lea.vmem %s1, %s172
        %s174 = smul.u32 4, %s10
      $region32: #{tpu_custom_call.1} parent=23 // pred_fallthru
        _
    $region24: #{tpu_custom_call.1} parent=5 // pred_fallthru
      _
    %p175 = scmp.le.s32.totalorder 1, %s10
    %p176 = scmp.lt.s32.totalorder %s10, 3
    %p177 = pnand %p175, %p176
    %p178 = pneg %p177
    // Predicated region
    $region33: #{tpu_custom_call.1} parent=5 // pred_check
      _
    $region34: #{tpu_custom_call.1} parent=5 // pred_check_branch
      %180 = sbr.rel (%p177) target = $region36
    $region35: #{tpu_custom_call.1} parent=5 // pred_region
      %s181 = ssub.s32 %s10, 1
      %s182 = smul.u32 4, %s15
      %p183 = scmp.lt.s32.totalorder %s182, 7
      %s184 = scalar_select %p183, %s182, 7
      %s185 = smul.addr %s184, 2
      %s186 = smul.addr %s185, 8
      %s187 = scalar_lea.vmem %s0, %s186
      %p188 = pneg %p36
      %p189 = pneg %p33
      %s190 = smul.u32 4, %s15
      %p191 = scmp.lt.s32.totalorder %s190, 7
      %s192 = scalar_select %p191, %s190, 7
      %s193 = smul.addr %s192, 2
      %s194 = smul.addr %s193, 8
      %s195 = scalar_lea.vmem %s1, %s194
      %p196 = pneg %p62
      %p197 = pneg %p59
      %p198 = pneg %p83
      %p199 = pneg %p80
      %p200 = pneg %p104
      %p201 = pneg %p101
      %p202 = pneg %p130
      %p203 = pneg %p127
      %s204 = smul.u32 4, %s15
      %p205 = scmp.lt.s32.totalorder %s204, 7
      %s206 = scalar_select %p205, %s204, 7
      %s207 = smul.addr %s206, 2
      %s208 = smul.addr %s207, 8
      %s209 = scalar_lea.vmem %s4, %s208
      %s210 = smul.u32 4, %s15
      %p211 = scmp.lt.s32.totalorder %s210, 7
      %s212 = scalar_select %p211, %s210, 7
      %s213 = smul.addr %s212, 2
      %s214 = smul.addr %s213, 8
      %s215 = scalar_lea.vmem %s0, %s214
      %s216 = smul.u32 4, %s15
      %s217 = smul.u32 4, %s15
      %p218 = scmp.lt.s32.totalorder %s217, 7
      %s219 = scalar_select %p218, %s217, 7
      %s220 = smul.addr %s219, 2
      %s221 = smul.addr %s220, 8
      %s222 = scalar_lea.vmem %s1, %s221
      %s223 = smul.u32 4, %s15
      %s224 = smul.u32 4, %s15
      %p225 = scmp.lt.s32.totalorder %s224, 7
      %s226 = scalar_select %p225, %s224, 7
      %s227 = smul.addr %s226, 2
      %s228 = smul.addr %s227, 8
      %s229 = scalar_lea.vmem %s4, %s228
      %s230 = smul.u32 4, %s15
      %v232 = vld [vmem:[%s2] sm:$0xf]
      %v233 = vld [vmem:[%s2 + $0x4] sm:$0xf]
      %v234 = vld [vmem:[%s3] sm:$0x1]
      %v235 = vld [vmem:[%s215] sm:$0xff]
      %v236 = vld [vmem:[%s215 + $0x8] sm:$0xff]
      %v237 = vld [vmem:[%s222] sm:$0xff]
      %v238 = vld [vmem:[%s222 + $0x8] sm:$0xff]
      %241 = vrot.lane.b32.xlu0 %v237, 6
      %v242 = vpop.permute.xlu0 %241
      %243 = vrot.lane.b32.xlu0 %v238, 6
      %v244 = vpop.permute.xlu0 %243
      %vm247 = vcmask 48128
      %v248 = vsel %vm247, %v235, %v242
      %v249 = vsel %vm247, %v236, %v244
      %v250 = vpack.c.bf16 %v249, %v248
      %v252 = vlaneseq
      %v253 = vshrl.u32 %v252, 7
      %v254 = vsub.s32 0, %v253
      %v255 = vrot.slane %v234, %v254
      %257 = vxpose.xlu0.c.b16.start [1/8] %v250, 128
      %258 = vxpose.xlu0.c.b16.cont [2/8] 0, 128
      %259 = vxpose.xlu0.c.b16.cont [3/8] 0, 128
      %260 = vxpose.xlu0.c.b16.cont [4/8] 0, 128
      %261 = vxpose.xlu0.c.b16.cont [5/8] 0, 128
      %262 = vxpose.xlu0.c.b16.cont [6/8] 0, 128
      %263 = vxpose.xlu0.c.b16.cont [7/8] 0, 128
      %264 = vxpose.xlu0.c.b16.end [8/8] 0, 128
      %v265 = vpop.trf.xlu0
      %v266 = vpop.trf.xlu0
      %v267 = vpop.trf.xlu0
      %v268 = vpop.trf.xlu0
      %v269 = vpop.trf.xlu0
      %v270 = vpop.trf.xlu0
      %v271 = vpop.trf.xlu0
      %v272 = vpop.trf.xlu0
      %v275 = vunpack.c.l.b16 %v232
      %v276 = vunpack.c.l.b16 %v233
      %v277 = vpack.c.b16 %v276, %v275
      %vm279 = vcmask 130048
      %v281 = vsel %vm279, %v265, 0
      %283 = vmatprep.subr.bf16.mxu0 0
      %284 = vmatpush1.bf16.msra.mxu0 %v277
      %285 = vmatprep.subr.bf16.mxu0 0
      %286 = vmatpush1.bf16.msra.mxu0 0
      %287 = vmatprep.subr.bf16.mxu0 0
      %288 = vmatpush1.bf16.msra.mxu0 0
      %289 = vmatprep.subr.bf16.mxu0 0
      %290 = vmatpush1.bf16.msra.mxu0 0
      %291 = vmatprep.subr.bf16.mxu0 0
      %292 = vmatpush1.bf16.msra.mxu0 0
      %293 = vmatprep.subr.bf16.mxu0 0
      %294 = vmatpush1.bf16.msra.mxu0 0
      %295 = vmatprep.subr.bf16.mxu0 0
      %296 = vmatpush1.bf16.msra.mxu0 0
      %297 = vmatprep.subr.bf16.mxu0 0
      %298 = vmatpush1.bf16.msra.mxu0 0
      %299 = vmatprep.subr.bf16.mxu0 0
      %300 = vmatpush1.bf16.msra.mxu0 0
      %301 = vmatprep.subr.bf16.mxu0 0
      %302 = vmatpush1.bf16.msra.mxu0 0
      %303 = vmatprep.subr.bf16.mxu0 0
      %304 = vmatpush1.bf16.msra.mxu0 0
      %305 = vmatprep.subr.bf16.mxu0 0
      %306 = vmatpush1.bf16.msra.mxu0 0
      %307 = vmatprep.subr.bf16.mxu0 0
      %308 = vmatpush1.bf16.msra.mxu0 0
      %309 = vmatprep.subr.bf16.mxu0 0
      %310 = vmatpush1.bf16.msra.mxu0 0
      %311 = vmatprep.subr.bf16.mxu0 0
      %312 = vmatpush1.bf16.msra.mxu0 0
      %313 = vmatprep.subr.bf16.mxu0 0
      %314 = vmatpush1.bf16.msra.mxu0 0
      %315 = vmatprep.mubr.bf16.mxu0 0
      %316 = vmatmul.mubr.bf16.gmra.mrb[0].mxu0 %v281
      %v317 = vpop.f32.mrb[0].mxu0
      %v318 = vadd.f32 %v255, %v317
      %v319 = vpop.f32.mrb[0].mxu0
      %v320 = vpop.f32.mrb[0].mxu0
      %v321 = vadd.f32 %v255, %v320
      %v322 = vpop.f32.mrb[0].mxu0
      %323 = vdwg.mxu0
      %324 = vst [vmem:[%s229] sm:$0xff] %v318
      %325 = vst [vmem:[%s229 + $0x8] sm:$0x3] %v321
      %s326 = scalar_lea.vmem %s215, 16
      %v327 = vld [vmem:[%s326] sm:$0xff]
      %v328 = vld [vmem:[%s326 + $0x8] sm:$0xff]
      %s329 = scalar_lea.vmem %s222, 16
      %v330 = vld [vmem:[%s329] sm:$0xff]
      %v331 = vld [vmem:[%s329 + $0x8] sm:$0xff]
      %334 = vrot.lane.b32.xlu0 %v330, 6
      %v335 = vpop.permute.xlu0 %334
      %336 = vrot.lane.b32.xlu0 %v331, 6
      %v337 = vpop.permute.xlu0 %336
      %v340 = vsel %vm247, %v327, %v335
      %v341 = vsel %vm247, %v328, %v337
      %v342 = vpack.c.bf16 %v341, %v340
      %343 = vxpose.xlu0.c.b16.start [1/8] %v342, 128
      %344 = vxpose.xlu0.c.b16.cont [2/8] 0, 128
      %345 = vxpose.xlu0.c.b16.cont [3/8] 0, 128
      %346 = vxpose.xlu0.c.b16.cont [4/8] 0, 128
      %347 = vxpose.xlu0.c.b16.cont [5/8] 0, 128
      %348 = vxpose.xlu0.c.b16.cont [6/8] 0, 128
      %349 = vxpose.xlu0.c.b16.cont [7/8] 0, 128
      %350 = vxpose.xlu0.c.b16.end [8/8] 0, 128
      %v351 = vpop.trf.xlu0
      %v352 = vpop.trf.xlu0
      %v353 = vpop.trf.xlu0
      %v354 = vpop.trf.xlu0
      %v355 = vpop.trf.xlu0
      %v356 = vpop.trf.xlu0
      %v357 = vpop.trf.xlu0
      %v358 = vpop.trf.xlu0
      %v360 = vsel %vm279, %v351, 0
      %362 = vmatprep.subr.bf16.mxu0 0
      %363 = vmatpush1.bf16.msra.mxu0 %v277
      %364 = vmatprep.subr.bf16.mxu0 0
      %365 = vmatpush1.bf16.msra.mxu0 0
      %366 = vmatprep.subr.bf16.mxu0 0
      %367 = vmatpush1.bf16.msra.mxu0 0
      %368 = vmatprep.subr.bf16.mxu0 0
      %369 = vmatpush1.bf16.msra.mxu0 0
      %370 = vmatprep.subr.bf16.mxu0 0
      %371 = vmatpush1.bf16.msra.mxu0 0
      %372 = vmatprep.subr.bf16.mxu0 0
      %373 = vmatpush1.bf16.msra.mxu0 0
      %374 = vmatprep.subr.bf16.mxu0 0
      %375 = vmatpush1.bf16.msra.mxu0 0
      %376 = vmatprep.subr.bf16.mxu0 0
      %377 = vmatpush1.bf16.msra.mxu0 0
      %378 = vmatprep.subr.bf16.mxu0 0
      %379 = vmatpush1.bf16.msra.mxu0 0
      %380 = vmatprep.subr.bf16.mxu0 0
      %381 = vmatpush1.bf16.msra.mxu0 0
      %382 = vmatprep.subr.bf16.mxu0 0
      %383 = vmatpush1.bf16.msra.mxu0 0
      %384 = vmatprep.subr.bf16.mxu0 0
      %385 = vmatpush1.bf16.msra.mxu0 0
      %386 = vmatprep.subr.bf16.mxu0 0
      %387 = vmatpush1.bf16.msra.mxu0 0
      %388 = vmatprep.subr.bf16.mxu0 0
      %389 = vmatpush1.bf16.msra.mxu0 0
      %390 = vmatprep.subr.bf16.mxu0 0
      %391 = vmatpush1.bf16.msra.mxu0 0
      %392 = vmatprep.subr.bf16.mxu0 0
      %393 = vmatpush1.bf16.msra.mxu0 0
      %394 = vmatprep.mubr.bf16.mxu0 0
      %395 = vmatmul.mubr.bf16.gmra.mrb[0].mxu0 %v360
      %v396 = vpop.f32.mrb[0].mxu0
      %v397 = vadd.f32 %v255, %v396
      %v398 = vpop.f32.mrb[0].mxu0
      %v399 = vpop.f32.mrb[0].mxu0
      %v400 = vadd.f32 %v255, %v399
      %v401 = vpop.f32.mrb[0].mxu0
      %402 = vdwg.mxu0
      %s403 = scalar_lea.vmem %s229, 16
      %404 = vst [vmem:[%s403] sm:$0xff] %v397
      %405 = vst [vmem:[%s403 + $0x8] sm:$0x3] %v400
      %s406 = scalar_lea.vmem %s215, 32
      %v407 = vld [vmem:[%s406] sm:$0xff]
      %v408 = vld [vmem:[%s406 + $0x8] sm:$0xff]
      %s409 = scalar_lea.vmem %s222, 32
      %v410 = vld [vmem:[%s409] sm:$0xff]
      %v411 = vld [vmem:[%s409 + $0x8] sm:$0xff]
      %414 = vrot.lane.b32.xlu0 %v410, 6
      %v415 = vpop.permute.xlu0 %414
      %416 = vrot.lane.b32.xlu0 %v411, 6
      %v417 = vpop.permute.xlu0 %416
      %v420 = vsel %vm247, %v407, %v415
      %v421 = vsel %vm247, %v408, %v417
      %v422 = vpack.c.bf16 %v421, %v420
      %423 = vxpose.xlu0.c.b16.start [1/8] %v422, 128
      %424 = vxpose.xlu0.c.b16.cont [2/8] 0, 128
      %425 = vxpose.xlu0.c.b16.cont [3/8] 0, 128
      %426 = vxpose.xlu0.c.b16.cont [4/8] 0, 128
      %427 = vxpose.xlu0.c.b16.cont [5/8] 0, 128
      %428 = vxpose.xlu0.c.b16.cont [6/8] 0, 128
      %429 = vxpose.xlu0.c.b16.cont [7/8] 0, 128
      %430 = vxpose.xlu0.c.b16.end [8/8] 0, 128
      %v431 = vpop.trf.xlu0
      %v432 = vpop.trf.xlu0
      %v433 = vpop.trf.xlu0
      %v434 = vpop.trf.xlu0
      %v435 = vpop.trf.xlu0
      %v436 = vpop.trf.xlu0
      %v437 = vpop.trf.xlu0
      %v438 = vpop.trf.xlu0
      %v440 = vsel %vm279, %v431, 0
      %442 = vmatprep.subr.bf16.mxu0 0
      %443 = vmatpush1.bf16.msra.mxu0 %v277
      %444 = vmatprep.subr.bf16.mxu0 0
      %445 = vmatpush1.bf16.msra.mxu0 0
      %446 = vmatprep.subr.bf16.mxu0 0
      %447 = vmatpush1.bf16.msra.mxu0 0
      %448 = vmatprep.subr.bf16.mxu0 0
      %449 = vmatpush1.bf16.msra.mxu0 0
      %450 = vmatprep.subr.bf16.mxu0 0
      %451 = vmatpush1.bf16.msra.mxu0 0
      %452 = vmatprep.subr.bf16.mxu0 0
      %453 = vmatpush1.bf16.msra.mxu0 0
      %454 = vmatprep.subr.bf16.mxu0 0
      %455 = vmatpush1.bf16.msra.mxu0 0
      %456 = vmatprep.subr.bf16.mxu0 0
      %457 = vmatpush1.bf16.msra.mxu0 0
      %458 = vmatprep.subr.bf16.mxu0 0
      %459 = vmatpush1.bf16.msra.mxu0 0
      %460 = vmatprep.subr.bf16.mxu0 0
      %461 = vmatpush1.bf16.msra.mxu0 0
      %462 = vmatprep.subr.bf16.mxu0 0
      %463 = vmatpush1.bf16.msra.mxu0 0
      %464 = vmatprep.subr.bf16.mxu0 0
      %465 = vmatpush1.bf16.msra.mxu0 0
      %466 = vmatprep.subr.bf16.mxu0 0
      %467 = vmatpush1.bf16.msra.mxu0 0
      %468 = vmatprep.subr.bf16.mxu0 0
      %469 = vmatpush1.bf16.msra.mxu0 0
      %470 = vmatprep.subr.bf16.mxu0 0
      %471 = vmatpush1.bf16.msra.mxu0 0
      %472 = vmatprep.subr.bf16.mxu0 0
      %473 = vmatpush1.bf16.msra.mxu0 0
      %474 = vmatprep.mubr.bf16.mxu0 0
      %475 = vmatmul.mubr.bf16.gmra.mrb[0].mxu0 %v440
      %v476 = vpop.f32.mrb[0].mxu0
      %v477 = vadd.f32 %v255, %v476
      %v478 = vpop.f32.mrb[0].mxu0
      %v479 = vpop.f32.mrb[0].mxu0
      %v480 = vadd.f32 %v255, %v479
      %v481 = vpop.f32.mrb[0].mxu0
      %482 = vdwg.mxu0
      %s483 = scalar_lea.vmem %s229, 32
      %484 = vst [vmem:[%s483] sm:$0xff] %v477
      %485 = vst [vmem:[%s483 + $0x8] sm:$0x3] %v480
      %s486 = scalar_lea.vmem %s215, 48
      %v487 = vld [vmem:[%s486] sm:$0xff]
      %v488 = vld [vmem:[%s486 + $0x8] sm:$0xff]
      %s489 = scalar_lea.vmem %s222, 48
      %v490 = vld [vmem:[%s489] sm:$0xff]
      %v491 = vld [vmem:[%s489 + $0x8] sm:$0xff]
      %494 = vrot.lane.b32.xlu0 %v490, 6
      %v495 = vpop.permute.xlu0 %494
      %496 = vrot.lane.b32.xlu0 %v491, 6
      %v497 = vpop.permute.xlu0 %496
      %v500 = vsel %vm247, %v487, %v495
      %v501 = vsel %vm247, %v488, %v497
      %v502 = vpack.c.bf16 %v501, %v500
      %503 = vxpose.xlu0.c.b16.start [1/8] %v502, 128
      %504 = vxpose.xlu0.c.b16.cont [2/8] 0, 128
      %505 = vxpose.xlu0.c.b16.cont [3/8] 0, 128
      %506 = vxpose.xlu0.c.b16.cont [4/8] 0, 128
      %507 = vxpose.xlu0.c.b16.cont [5/8] 0, 128
      %508 = vxpose.xlu0.c.b16.cont [6/8] 0, 128
      %509 = vxpose.xlu0.c.b16.cont [7/8] 0, 128
      %510 = vxpose.xlu0.c.b16.end [8/8] 0, 128
      %v511 = vpop.trf.xlu0
      %v512 = vpop.trf.xlu0
      %v513 = vpop.trf.xlu0
      %v514 = vpop.trf.xlu0
      %v515 = vpop.trf.xlu0
      %v516 = vpop.trf.xlu0
      %v517 = vpop.trf.xlu0
      %v518 = vpop.trf.xlu0
      %v520 = vsel %vm279, %v511, 0
      %522 = vmatprep.subr.bf16.mxu0 0
      %523 = vmatpush1.bf16.msra.mxu0 %v277
      %524 = vmatprep.subr.bf16.mxu0 0
      %525 = vmatpush1.bf16.msra.mxu0 0
      %526 = vmatprep.subr.bf16.mxu0 0
      %527 = vmatpush1.bf16.msra.mxu0 0
      %528 = vmatprep.subr.bf16.mxu0 0
      %529 = vmatpush1.bf16.msra.mxu0 0
      %530 = vmatprep.subr.bf16.mxu0 0
      %531 = vmatpush1.bf16.msra.mxu0 0
      %532 = vmatprep.subr.bf16.mxu0 0
      %533 = vmatpush1.bf16.msra.mxu0 0
      %534 = vmatprep.subr.bf16.mxu0 0
      %535 = vmatpush1.bf16.msra.mxu0 0
      %536 = vmatprep.subr.bf16.mxu0 0
      %537 = vmatpush1.bf16.msra.mxu0 0
      %538 = vmatprep.subr.bf16.mxu0 0
      %539 = vmatpush1.bf16.msra.mxu0 0
      %540 = vmatprep.subr.bf16.mxu0 0
      %541 = vmatpush1.bf16.msra.mxu0 0
      %542 = vmatprep.subr.bf16.mxu0 0
      %543 = vmatpush1.bf16.msra.mxu0 0
      %544 = vmatprep.subr.bf16.mxu0 0
      %545 = vmatpush1.bf16.msra.mxu0 0
      %546 = vmatprep.subr.bf16.mxu0 0
      %547 = vmatpush1.bf16.msra.mxu0 0
      %548 = vmatprep.subr.bf16.mxu0 0
      %549 = vmatpush1.bf16.msra.mxu0 0
      %550 = vmatprep.subr.bf16.mxu0 0
      %551 = vmatpush1.bf16.msra.mxu0 0
      %552 = vmatprep.subr.bf16.mxu0 0
      %553 = vmatpush1.bf16.msra.mxu0 0
      %554 = vmatprep.mubr.bf16.mxu0 0
      %555 = vmatmul.mubr.bf16.gmra.mrb[0].mxu0 %v520
      %v556 = vpop.f32.mrb[0].mxu0
      %v557 = vadd.f32 %v255, %v556
      %v558 = vpop.f32.mrb[0].mxu0
      %v559 = vpop.f32.mrb[0].mxu0
      %v560 = vadd.f32 %v255, %v559
      %v561 = vpop.f32.mrb[0].mxu0
      %562 = vdwg.mxu0
      %s563 = scalar_lea.vmem %s229, 48
      %564 = vst [vmem:[%s563] sm:$0xff] %v557
      %565 = vst [vmem:[%s563 + $0x8] sm:$0x3] %v560
      %s566 = smul.u32 4, %s15
      %p567 = scmp.lt.s32.totalorder %s566, 7
      %s568 = scalar_select %p567, %s566, 7
      %s569 = smul.addr %s568, 2
      %s570 = smul.addr %s569, 8
      %s571 = scalar_lea.vmem %s4, %s570
      // Predicated region
      $region37: #{tpu_custom_call.1} parent=35 // pred_check
        %p572 = pneg %p127
      $region38: #{tpu_custom_call.1} parent=35 // pred_check_branch
        %574 = sbr.rel (%p572) target = $region40
      $region39: #{tpu_custom_call.1} parent=35 // pred_region
        %s575 = smul.u32 4, %s15
      $region40: #{tpu_custom_call.1} parent=35 // pred_fallthru
        _
    $region36: #{tpu_custom_call.1} parent=5 // pred_fallthru
      _
    %p576 = scmp.le.s32.totalorder 2, %s10
    // Predicated region
    $region41: #{tpu_custom_call.1} parent=5 // pred_check
      %p577 = pneg %p576
    $region42: #{tpu_custom_call.1} parent=5 // pred_check_branch
      %579 = sbr.rel (%p577) target = $region44
    $region43: #{tpu_custom_call.1} parent=5 // pred_region
      %s580 = ssub.s32 %s10, 2
      // Predicated region
      $region45: #{tpu_custom_call.1} parent=43 // pred_check
        %p581 = pneg %p133
      $region46: #{tpu_custom_call.1} parent=43 // pred_check_branch
        %583 = sbr.rel (%p581) target = $region48
      $region47: #{tpu_custom_call.1} parent=43 // pred_region
        %s584 = smul.u32 4, %s16
        %p585 = scmp.lt.s32.totalorder %s584, 7
        %s586 = scalar_select %p585, %s584, 7
        %s587 = smul.addr %s586, 2
        %s588 = smul.addr %s587, 8
        %s589 = scalar_lea.vmem %s4, %s588
      $region48: #{tpu_custom_call.1} parent=43 // pred_fallthru
        _
    $region44: #{tpu_custom_call.1} parent=5 // pred_fallthru
      _
  $region6: #{tpu_custom_call.1} parent=0 // loop_footer
    %s14 = sadd.s32 1, %s10
  $region7: #{tpu_custom_call.1} parent=0 // loop_footer_branch
    %9 = sbr.rel target = $region3
  $region8: #{tpu_custom_call.1} parent=0 // loop_exit
    _

</llo_original>
